<compile_context>
chip_gen: v5e
topology: v5e:2x2
jax: 0.10.0
libtpu: 0.0.40
codegen_flags: <defaults>
</compile_context>

<pallas_src>
import functools

import jax
import jax.numpy as jnp
from jax import lax
from jax.experimental import pallas as pl
from jax.experimental.pallas import tpu as pltpu

_EPS_SQ = 1e-24  # F.normalize uses eps=1e-12 on the norm -> eps^2 on the sumsq


def _contrastive_loss_kernel(z1_ref, z2_ref, loss_ref, l_sc, diag_sc, *,
                             inv_temp, blk, valid_cols, has_pad):
    """Grid = (row blocks i, col blocks j); j is the innermost reduction axis.

    z1_ref : (blk, D) bf16, L2-normalized rows pre-scaled by 1/temperature.
    z2_ref : (blk, D) bf16, L2-normalized rows (the "keys" / columns of sim).
    """
    i = pl.program_id(0)
    j = pl.program_id(1)

    @pl.when(j == 0)
    def _():
        l_sc[...] = jnp.zeros_like(l_sc)

    # (blk, blk) similarity tile on the MXU; contract last dims (no relayout).
    # Inputs are bf16 -> bf16 MXU path with f32 accumulation.
    sim = lax.dot_general(z1_ref[...], z2_ref[...],
                          (((1,), (1,)), ((), ())),
                          preferred_element_type=jnp.float32)

    # Target logits: tb == tc, so at column step j == i the tile diagonal is
    # the global diagonal. Same MXU path as the logsumexp terms.
    @pl.when(j == i)
    def _():
        rows = lax.broadcasted_iota(jnp.int32, sim.shape, 0)
        cols = lax.broadcasted_iota(jnp.int32, sim.shape, 1)
        diag_sc[...] = jnp.sum(jnp.where(rows == cols, sim, 0.0),
                               axis=1, keepdims=True)

    # Constant-max logsumexp: rows are unit-norm so sim <= inv_temp exactly.
    p = jnp.exp(sim - inv_temp)
    if has_pad:  # static: only emitted when B was padded up to B_pad
        col_ids = j * blk + lax.broadcasted_iota(jnp.int32, sim.shape, 1)
        p = jnp.where(col_ids < valid_cols, p, 0.0)
    l_sc[...] = l_sc[...] + jnp.sum(p, axis=1, keepdims=True)

    # Finalize: per-row loss = logsumexp - target_logit.
    @pl.when(j == pl.num_programs(1) - 1)
    def _():
        loss_ref[...] = (inv_temp + jnp.log(l_sc[...])) - diag_sc[...]


def _round_up(x, m):
    return ((x + m - 1) // m) * m


def contrastive_loss(z1, z2, temperature=0.5, *, block=256):
    """Pallas TPU implementation of ContrastiveLoss.forward(z1, z2).

    `block` may be raised to 512 on v5e/v6e (128 MiB VMEM) to cut z2
    re-streaming; keep <= 256 on v7x (64 MiB VMEM) for large D.
    """
    assert z1.shape == z2.shape and z1.ndim == 2
    B, D = z1.shape
    inv_temp = float(1.0 / temperature)

    # ---- normalize once in XLA, fold 1/T into z1, cast to bf16 for the MXU --
    z1f = z1.astype(jnp.float32)
    z2f = z2.astype(jnp.float32)
    z1n = z1f * (lax.rsqrt(jnp.maximum(jnp.sum(z1f * z1f, axis=1, keepdims=True),
                                       _EPS_SQ)) * inv_temp)
    z2n = z2f * lax.rsqrt(jnp.maximum(jnp.sum(z2f * z2f, axis=1, keepdims=True),
                                      _EPS_SQ))
    z1n = z1n.astype(jnp.bfloat16)
    z2n = z2n.astype(jnp.bfloat16)

    # ---- tiling: tb == tc == blk; pad B up to a multiple of blk -------------
    blk = block if B >= block else _round_up(B, 8)
    B_pad = _round_up(B, blk)
    has_pad = B_pad != B
    if has_pad:
        pad = ((0, B_pad - B), (0, 0))
        z1n = jnp.pad(z1n, pad)   # zero rows -> zero logits, sliced off below
        z2n = jnp.pad(z2n, pad)   # zero cols -> masked out of the logsumexp
    n_blocks = B_pad // blk

    kernel = functools.partial(_contrastive_loss_kernel, inv_temp=inv_temp,
                               blk=blk, valid_cols=B, has_pad=has_pad)

    per_row = pl.pallas_call(
        kernel,
        out_shape=jax.ShapeDtypeStruct((B_pad, 1), jnp.float32),
        grid_spec=pltpu.PrefetchScalarGridSpec(
            num_scalar_prefetch=0,
            grid=(n_blocks, n_blocks),            # (row blocks, col blocks)
            in_specs=[
                pl.BlockSpec((blk, D), lambda i, j: (i, 0)),  # z1n * 1/T rows
                pl.BlockSpec((blk, D), lambda i, j: (j, 0)),  # z2n key rows
            ],
            out_specs=pl.BlockSpec((blk, 1), lambda i, j: (i, 0)),
            scratch_shapes=[
                pltpu.VMEM((blk, 1), jnp.float32),  # running denominator l
                pltpu.VMEM((blk, 1), jnp.float32),  # diagonal (target) logits
            ],
        ),
        compiler_params=pltpu.CompilerParams(
            dimension_semantics=("parallel", "arbitrary"),
            vmem_limit_bytes=48 * 1024 * 1024),   # headroom under v7x's 64 MiB
    )(z1n, z2n)

    # Mean over the real (unpadded) rows; trivial XLA reduction.
    return jnp.mean(per_row[:B, 0])


def _reference_loss(z1, z2, temperature=0.5):
    z1 = z1.astype(jnp.float32)
    z2 = z2.astype(jnp.float32)
    z1n = z1 / jnp.maximum(jnp.linalg.norm(z1, axis=1, keepdims=True), 1e-12)
    z2n = z2 / jnp.maximum(jnp.linalg.norm(z2, axis=1, keepdims=True), 1e-12)
    sim = (z1n @ z2n.T) / temperature
    logp = jax.nn.log_softmax(sim, axis=1)
    return -jnp.mean(jnp.diagonal(logp))


if __name__ == "__main__":
    key = jax.random.PRNGKey(0)

    def run_case(B, D, temperature, block):
        k1, k2 = jax.random.split(jax.random.fold_in(key, B * 1000 + D))
        z1 = jax.random.normal(k1, (B, D), dtype=jnp.float32)
        z2 = jax.random.normal(k2, (B, D), dtype=jnp.float32)
        out = jax.block_until_ready(
            contrastive_loss(z1, z2, temperature, block=block))
        ref = _reference_loss(z1, z2, temperature)
        # bf16 MXU path: allow a few e-3 of absolute error on the scalar loss.
        assert jnp.allclose(out, ref, atol=3e-2, rtol=3e-2), (B, D, out, ref)

    run_case(8, 32, 0.5, 256)    # module-scale case: single block, no padding
    run_case(9, 32, 0.5, 256)    # batch not multiple of 8 -> padded columns
    run_case(40, 32, 0.5, 16)    # multi-block grid + padding + diag at j == i
    print("KERNEL_OK")
</pallas_src>

<mosaic_0001>
module attributes {stable_mosaic.version = 11 : i64} {
  func.func @_contrastive_loss_kernel(%arg0: i32, %arg1: i32, %arg2: memref<8x32xbf16, #tpu.memory_space<vmem>>, %arg3: memref<8x32xbf16, #tpu.memory_space<vmem>>, %arg4: memref<8x1xf32, #tpu.memory_space<vmem>>, %arg5: memref<8x1xf32, #tpu.memory_space<vmem>>, %arg6: memref<8x1xf32, #tpu.memory_space<vmem>>) attributes {dimension_semantics = [#tpu.dimension_semantics<parallel>, #tpu.dimension_semantics<arbitrary>], iteration_bounds = array<i64: 1, 1>, scalar_prefetch = 0 : i64, scratch_operands = 2 : i64, tpu.core_type = #tpu.core_type<tc>, window_params = [{transform_indices = @transform_0, window_bounds = array<i64: 8, 32>}, {transform_indices = @transform_1, window_bounds = array<i64: 8, 32>}, {transform_indices = @transform_2, window_bounds = array<i64: 8, 1>}]} {
    %c0_i32 = arith.constant 0 : i32
    %0 = arith.cmpi eq, %arg1, %c0_i32 : i32
    %1 = arith.extui %0 : i1 to i32
    %c0_i32_0 = arith.constant 0 : i32
    %2 = arith.cmpi ne, %1, %c0_i32_0 : i32
    scf.if %2 {
      %cst_13 = arith.constant 0.000000e+00 : f32
      %20 = vector.broadcast %cst_13 : f32 to vector<8x1xf32>
      %c0_14 = arith.constant 0 : index
      %c0_15 = arith.constant 0 : index
      %21 = vector.load %arg5[%c0_14, %c0_15] : memref<8x1xf32, #tpu.memory_space<vmem>>, vector<8x1xf32>
      tpu.vector_store %arg5[%c0_14, %c0_15], %20 {strides = array<i32>} : memref<8x1xf32, #tpu.memory_space<vmem>>, vector<8x1xf32>,
    } else {
    }
    %c0 = arith.constant 0 : index
    %c0_1 = arith.constant 0 : index
    %3 = vector.load %arg2[%c0, %c0_1] : memref<8x32xbf16, #tpu.memory_space<vmem>>, vector<8x32xbf16>
    %c0_2 = arith.constant 0 : index
    %c0_3 = arith.constant 0 : index
    %4 = vector.load %arg3[%c0_2, %c0_3] : memref<8x32xbf16, #tpu.memory_space<vmem>>, vector<8x32xbf16>
    %cst = arith.constant dense<0.000000e+00> : vector<8x8xf32>
    %5 = tpu.matmul %3, %4, %cst {dimension_numbers = #tpu.dot_dimension_numbers<[1], [1], [0], [0], [0, 0, 1, 0], [], []>} : vector<8x32xbf16>, vector<8x32xbf16>, vector<8x8xf32> -> vector<8x8xf32>
    %6 = arith.cmpi eq, %arg1, %arg0 : i32
    %7 = arith.extui %6 : i1 to i32
    %c0_i32_4 = arith.constant 0 : i32
    %8 = arith.cmpi ne, %7, %c0_i32_4 : i32
    scf.if %8 {
      %20 = tpu.iota {dimensions = array<i32: 0>} : vector<8x8xi32>
      %21 = tpu.iota {dimensions = array<i32: 1>} : vector<8x8xi32>
      %22 = arith.cmpi eq, %20, %21 : vector<8x8xi32>
      %cst_13 = arith.constant 0.000000e+00 : f32
      %23 = vector.broadcast %cst_13 : f32 to vector<8x8xf32>
      %24 = arith.select %22, %5, %23 : vector<8x8xi1>, vector<8x8xf32>
      %cst_14 = arith.constant dense<0.000000e+00> : vector<8xf32>
      %25 = vector.multi_reduction <add>, %24, %cst_14 [1] : vector<8x8xf32> to vector<8xf32>
      %26 = vector.shape_cast %25 : vector<8xf32> to vector<8x1xf32>
      %c0_15 = arith.constant 0 : index
      %c0_16 = arith.constant 0 : index
      %27 = vector.load %arg6[%c0_15, %c0_16] : memref<8x1xf32, #tpu.memory_space<vmem>>, vector<8x1xf32>
      tpu.vector_store %arg6[%c0_15, %c0_16], %26 {strides = array<i32>} : memref<8x1xf32, #tpu.memory_space<vmem>>, vector<8x1xf32>,
    } else {
    }
    %cst_5 = arith.constant 2.000000e+00 : f32
    %9 = vector.broadcast %cst_5 : f32 to vector<8x8xf32>
    %10 = arith.subf %5, %9 : vector<8x8xf32>
    %11 = math.exp %10 : vector<8x8xf32>
    %c0_6 = arith.constant 0 : index
    %c0_7 = arith.constant 0 : index
    %12 = vector.load %arg5[%c0_6, %c0_7] : memref<8x1xf32, #tpu.memory_space<vmem>>, vector<8x1xf32>
    %cst_8 = arith.constant dense<0.000000e+00> : vector<8xf32>
    %13 = vector.multi_reduction <add>, %11, %cst_8 [1] : vector<8x8xf32> to vector<8xf32>
    %14 = vector.shape_cast %13 : vector<8xf32> to vector<8x1xf32>
    %15 = arith.addf %12, %14 : vector<8x1xf32>
    %c0_9 = arith.constant 0 : index
    %c0_10 = arith.constant 0 : index
    %16 = vector.load %arg5[%c0_9, %c0_10] : memref<8x1xf32, #tpu.memory_space<vmem>>, vector<8x1xf32>
    tpu.vector_store %arg5[%c0_9, %c0_10], %15 {strides = array<i32>} : memref<8x1xf32, #tpu.memory_space<vmem>>, vector<8x1xf32>,
    %c0_i32_11 = arith.constant 0 : i32
    %17 = arith.cmpi eq, %arg1, %c0_i32_11 : i32
    %18 = arith.extui %17 : i1 to i32
    %c0_i32_12 = arith.constant 0 : i32
    %19 = arith.cmpi ne, %18, %c0_i32_12 : i32
    scf.if %19 {
      %c0_13 = arith.constant 0 : index
      %c0_14 = arith.constant 0 : index
      %20 = vector.load %arg5[%c0_13, %c0_14] : memref<8x1xf32, #tpu.memory_space<vmem>>, vector<8x1xf32>
      %21 = math.log %20 : vector<8x1xf32>
      %cst_15 = arith.constant 2.000000e+00 : f32
      %22 = vector.broadcast %cst_15 : f32 to vector<8x1xf32>
      %23 = arith.addf %22, %21 : vector<8x1xf32>
      %c0_16 = arith.constant 0 : index
      %c0_17 = arith.constant 0 : index
      %24 = vector.load %arg6[%c0_16, %c0_17] : memref<8x1xf32, #tpu.memory_space<vmem>>, vector<8x1xf32>
      %25 = arith.subf %23, %24 : vector<8x1xf32>
      %c0_18 = arith.constant 0 : index
      %c0_19 = arith.constant 0 : index
      %26 = vector.load %arg4[%c0_18, %c0_19] : memref<8x1xf32, #tpu.memory_space<vmem>>, vector<8x1xf32>
      tpu.vector_store %arg4[%c0_18, %c0_19], %25 {strides = array<i32>} : memref<8x1xf32, #tpu.memory_space<vmem>>, vector<8x1xf32>,
    } else {
    }
    return
  }
  func.func @transform_0(%arg0: i32, %arg1: i32) -> (i32, i32) {
    %c0_i32 = arith.constant 0 : i32
    %c0_i32_0 = arith.constant 0 : i32
    return %arg0, %c0_i32 : i32, i32
  }
  func.func @transform_1(%arg0: i32, %arg1: i32) -> (i32, i32) {
    %c0_i32 = arith.constant 0 : i32
    %c0_i32_0 = arith.constant 0 : i32
    return %arg1, %c0_i32 : i32, i32
  }
  func.func @transform_2(%arg0: i32, %arg1: i32) -> (i32, i32) {
    %c0_i32 = arith.constant 0 : i32
    %c0_i32_0 = arith.constant 0 : i32
    return %arg0, %c0_i32 : i32, i32
  }
}

</mosaic_0001>

<llo_original>
// kernel: tpu_custom_call.1
$region0: #{tpu_custom_call.1}
  #allocation0 [shape = 'u32[]', space=smem, size = 0x4, offset = 0x4, fixed_abs, tag = 'smem constant byte address 0x4 - core index']
  #allocation1 [shape = 'u32[72,128]{1,0:T(1,128)}', space=vmem, size = 0x9000, scoped, tag = 'internal scratch']
  #allocation2 [shape = 'f32[8,1]{1,0:T(8,128)}', space=vmem, size = 0x1000, scoped, tag = 'scratch operand']
  #allocation3 [shape = 'f32[8,1]{1,0:T(8,128)}', space=vmem, size = 0x1000, scoped, tag = 'scratch operand']
  %s0 = inlined_call_operand.hbm [shape: bf16[8,32], index: 0, kind: input, shape index: {}]
  %s1 = inlined_call_operand.hbm [shape: bf16[8,32], index: 1, kind: input, shape index: {}]
  %s2 = inlined_call_operand.vmem [shape: f32[8,1], index: 2, kind: output, shape index: {}]
  %s3 = sld [smem:[#allocation0]]
  $region38: #{tpu_custom_call.1} parent=0
    _
  %s5 = ssub.s32 1, %s3
  %s6 = scalar_select 0, %s5, %s3
  $region1: #{tpu_custom_call.1} parent=0
    #allocation4 [shape = 'u8[2048]{0}', space=vmem, size = 0x800, scoped, tag = 'input window, operand 0, single buffered']
    #allocation5 [shape = 's32[1]{0}', space=sflag, size = 0x4, scoped, tag = 'scoped memory for tpu_custom_call.1']
    #allocation6 [shape = 'u8[2048]{0}', space=vmem, size = 0x800, scoped, tag = 'input window, operand 1, single buffered']
    #allocation7 [shape = 's32[1]{0}', space=sflag, size = 0x4, scoped, tag = 'scoped memory for tpu_custom_call.1']
    %7 = vsyncpa [#allocation5], 0
    %8 = vsyncpa [#allocation7], 0
    // Predicated region
    $region2: #{tpu_custom_call.1} parent=1 // pred_check
      _
    $region3: #{tpu_custom_call.1} parent=1 // pred_check_branch
      %10 = sbr.rel (0) target = $region5
    $region4: #{tpu_custom_call.1} parent=1 // pred_region
      %12 = vsyncadd [#allocation5], 0
      %s14 = sshll.u32 %s0, 4
      %s15 = int_to_ptr.hbm [resolvable:$true] %s14
      %s16 = sshll.u32 [#allocation4], 4
      %s17 = int_to_ptr.vmem [resolvable:$true] %s16
      %19 = dma.hbm_to_vmem [thread:$0]  %s15, 64, %s17, [#allocation5]
    $region5: #{tpu_custom_call.1} parent=1 // pred_fallthru
      _
    // Predicated region
    $region6: #{tpu_custom_call.1} parent=1 // pred_check
      _
    $region7: #{tpu_custom_call.1} parent=1 // pred_check_branch
      %21 = sbr.rel (0) target = $region9
    $region8: #{tpu_custom_call.1} parent=1 // pred_region
      %23 = vsyncadd [#allocation7], 0
      %s25 = sshll.u32 %s1, 4
      %s26 = int_to_ptr.hbm [resolvable:$true] %s25
      %s27 = sshll.u32 [#allocation6], 4
      %s28 = int_to_ptr.vmem [resolvable:$true] %s27
      %30 = dma.hbm_to_vmem [thread:$0]  %s26, 64, %s28, [#allocation7]
    $region9: #{tpu_custom_call.1} parent=1 // pred_fallthru
      _
    // Predicated region
    $region10: #{tpu_custom_call.1} parent=1 // pred_check
      _
    $region11: #{tpu_custom_call.1} parent=1 // pred_check_branch
      %32 = sbr.rel (0) target = $region13
    $region12: #{tpu_custom_call.1} parent=1 // pred_region
      %34 = dma.done [#allocation5], 64
    $region13: #{tpu_custom_call.1} parent=1 // pred_fallthru
      _
    // Predicated region
    $region14: #{tpu_custom_call.1} parent=1 // pred_check
      _
    $region15: #{tpu_custom_call.1} parent=1 // pred_check_branch
      %36 = sbr.rel (0) target = $region17
    $region16: #{tpu_custom_call.1} parent=1 // pred_region
      %38 = dma.done [#allocation7], 64
    $region17: #{tpu_custom_call.1} parent=1 // pred_fallthru
      _
    %p40 = scmp.eq.s32.totalorder 0, 0
    // Predicated region
    $region18: #{tpu_custom_call.1} parent=1 // pred_check
      %p41 = pneg %p40
    $region19: #{tpu_custom_call.1} parent=1 // pred_check_branch
      %43 = sbr.rel (%p41) target = $region21
    $region20: #{tpu_custom_call.1} parent=1 // pred_region
      %vm44 = vcmask 7168
      %45 = vst.msk [vmem:[#allocation2] sm:$0xff] %vm44, 0.0
    $region21: #{tpu_custom_call.1} parent=1 // pred_fallthru
      _
    %v46 = vld [vmem:[#allocation4] sm:$0xf]
    %v47 = vld [vmem:[#allocation6] sm:$0xf]
    %vm48 = vcmask 261120
    %v50 = vsel %vm48, %v46, 0
    %v53 = vsel %vm48, %v47, 0
    %55 = vmatpush.bf16.xpose.msra.mxu0 0
    %56 = vmatpush.bf16.xpose.msra.mxu0 0
    %57 = vmatpush.bf16.xpose.msra.mxu0 0
    %58 = vmatpush.bf16.xpose.msra.mxu0 0
    %59 = vmatpush.bf16.xpose.msra.mxu0 0
    %60 = vmatpush.bf16.xpose.msra.mxu0 0
    %61 = vmatpush.bf16.xpose.msra.mxu0 0
    %62 = vmatpush.bf16.xpose.msra.mxu0 %v53
    %63 = vmatmul.bf16.gmra.mxu0 %v50
    %v64 = vpop.f32.mrf.mxu0
    %v65 = vadd.f32 0.0, %v64
    %v66 = vpop.f32.mrf.mxu0
    %67 = vdwg.mxu0
    %p68 = scmp.eq.s32.totalorder 0, 0
    // Predicated region
    $region22: #{tpu_custom_call.1} parent=1 // pred_check
      %p69 = pneg %p68
    $region23: #{tpu_custom_call.1} parent=1 // pred_check_branch
      %71 = sbr.rel (%p69) target = $region25
    $region24: #{tpu_custom_call.1} parent=1 // pred_region
      %v72 = vlaneseq
      %v73 = vshrl.u32 %v72, 7
      %v74 = vlaneseq
      %v75 = vand.u32 %v74, 127
      %vm76 = vcmp.eq.s32.totalorder %v73, %v75
      %v77 = vsel %vm76, %v65, 0.0
      %vm78 = vcmask 64512
      %v79 = vsel %vm78, %v77, 0.0
      %80 = vadd.xlane.f32.xlu0 %v79
      %v81 = vpop.xlane.xlu0 %80
      %vm82 = vcmask 7168
      %83 = vst.msk [vmem:[#allocation3] sm:$0xff] %vm82, %v81
    $region25: #{tpu_custom_call.1} parent=1 // pred_fallthru
      _
    %v84 = vsub.f32 %v65, 2.0
    %v85 = vmul.f32 %v84, 1.442695
    %v86 = vpow.pop %v85
    %v87 = vld [vmem:[#allocation2] sm:$0xff]
    %vm88 = vcmask 64512
    %v89 = vsel %vm88, %v86, 0.0
    %90 = vadd.xlane.f32.xlu0 %v89
    %v91 = vpop.xlane.xlu0 %90
    %v92 = vadd.f32 %v87, %v91
    %vm93 = vcmask 7168
    %94 = vst.msk [vmem:[#allocation2] sm:$0xff] %vm93, %v92
    // Predicated region
    $region26: #{tpu_custom_call.1} parent=1 // pred_check
      %p95 = pneg %p40
    $region27: #{tpu_custom_call.1} parent=1 // pred_check_branch
      %97 = sbr.rel (%p95) target = $region29
    $region28: #{tpu_custom_call.1} parent=1 // pred_region
      %v98 = vld [vmem:[#allocation2] sm:$0xff]
      %v99 = vlog2.pop %v98
      %v100 = vmul.f32 %v99, 0.6931472
      %v101 = vadd.f32 %v100, 2.0
      %v102 = vld [vmem:[#allocation3] sm:$0xff]
      %v103 = vsub.f32 %v101, %v102
      %104 = vst.msk [vmem:[%s2] sm:$0xff] %vm93, %v103
    $region29: #{tpu_custom_call.1} parent=1 // pred_fallthru
      _
    // Predicated region
    $region30: #{tpu_custom_call.1} parent=1 // pred_check
      _
    $region31: #{tpu_custom_call.1} parent=1 // pred_check_branch
      %106 = sbr.rel (0) target = $region33
    $region32: #{tpu_custom_call.1} parent=1 // pred_region
      _
    $region33: #{tpu_custom_call.1} parent=1 // pred_fallthru
      _
    // Predicated region
    $region34: #{tpu_custom_call.1} parent=1 // pred_check
      _
    $region35: #{tpu_custom_call.1} parent=1 // pred_check_branch
      %108 = sbr.rel (0) target = $region37
    $region36: #{tpu_custom_call.1} parent=1 // pred_region
      _
    $region37: #{tpu_custom_call.1} parent=1 // pred_fallthru
      _
    %109 = vsyncpa [#allocation5], 1
    %110 = vsyncpa [#allocation7], 1

</llo_original>
